<compile_context>
chip_gen: v6e
topology: v6e:2x2x1
jax: 0.10.0
libtpu: 0.0.40
codegen_flags: <defaults>
</compile_context>

<pallas_src>
import functools

import jax
import jax.numpy as jnp
from jax import lax
from jax.experimental import pallas as pl
from jax.experimental.pallas import tpu as pltpu


def _user_projection_kernel(users_ref, table_ref, *rest, apply_dropout: bool):
    """Gather rows of the embedding table (+ optional dropout mask multiply).

    users_ref : (TILE_B, 1) int32 VMEM  -- user ids for this batch tile
    table_ref : (N, D)      f32  VMEM  -- full embedding table (resident)
    mask_ref  : (TILE_B, D) f32  VMEM  -- pre-scaled dropout mask (training only)
    o_ref     : (TILE_B, D) f32  VMEM
    """
    if apply_dropout:
        mask_ref, o_ref = rest
    else:
        (o_ref,) = rest

    idx = users_ref[...]                                   # (TILE_B, 1) int32
    tile_b = idx.shape[0]
    n_users = table_ref.shape[0]

    # One-hot gather on the MXU: exact (each output element is 1.0*x + 0.0*...).
    row_iota = lax.broadcasted_iota(jnp.int32, (tile_b, n_users), dimension=1)
    onehot = (row_iota == idx).astype(table_ref.dtype)     # (TILE_B, N)
    rows = jnp.dot(onehot, table_ref[...],
                   preferred_element_type=jnp.float32)     # (TILE_B, D)

    if apply_dropout:
        # Inverted dropout: mask already holds 0 or 1/(1-p).
        rows = rows * mask_ref[...].astype(jnp.float32)

    o_ref[...] = rows.astype(o_ref.dtype)


def _pick_tile_b(batch: int) -> int:
    """Largest power-of-two tile (>=8) that divides the batch; else the batch."""
    for t in (1024, 512, 256, 128, 64, 32, 16, 8):
        if batch % t == 0:
            return t
    return batch


def user_projection(users: jax.Array,
                    user_embedding: jax.Array,
                    *,
                    dropout_probability: float = 0.0,
                    training: bool = False,
                    rng_key: jax.Array | None = None,
                    tile_b: int | None = None) -> jax.Array:
    """Pallas wrapper for UserProjection.forward.

    users          : (B,)   integer user ids
    user_embedding : (N, D) float32 embedding table
    returns        : (B, D) float32
    """
    batch = users.shape[0]
    n_users, emb_dim = user_embedding.shape

    users_2d = users.astype(jnp.int32).reshape(batch, 1)
    if tile_b is None:
        tile_b = _pick_tile_b(batch)
    grid = (batch // tile_b,)

    apply_dropout = bool(training) and float(dropout_probability) > 0.0

    in_specs = [
        pl.BlockSpec((tile_b, 1), lambda i: (i, 0)),          # user ids (batch tile)
        pl.BlockSpec((n_users, emb_dim), lambda i: (0, 0)),   # table, VMEM-resident
    ]
    args = [users_2d, user_embedding]

    if apply_dropout:
        if rng_key is None:
            rng_key = jax.random.PRNGKey(0)
        keep = jax.random.bernoulli(
            rng_key, 1.0 - float(dropout_probability), (batch, emb_dim))
        mask = keep.astype(user_embedding.dtype) * (
            1.0 / (1.0 - float(dropout_probability)))
        in_specs.append(pl.BlockSpec((tile_b, emb_dim), lambda i: (i, 0)))
        args.append(mask)

    kernel = functools.partial(_user_projection_kernel,
                               apply_dropout=apply_dropout)

    out = pl.pallas_call(
        kernel,
        out_shape=jax.ShapeDtypeStruct((batch, emb_dim), user_embedding.dtype),
        grid=grid,
        in_specs=in_specs,
        out_specs=pl.BlockSpec((tile_b, emb_dim), lambda i: (i, 0)),
        compiler_params=pltpu.CompilerParams(
            dimension_semantics=("parallel",),
            vmem_limit_bytes=32 * 1024 * 1024,
        ),
    )(*args)
    return out


if __name__ == "__main__":
    # Small deterministic example consistent with the module.
    num_users = 64
    user_embedding_dim = 128        # lane-dense output (multiple of 128)
    batch = 8
    dropout_probability = 0.1

    key = jax.random.PRNGKey(0)
    k_table, k_users, k_drop = jax.random.split(key, 3)

    # Matches nn.Parameter(torch.rand(num_users, user_embedding_dim)): U[0, 1).
    user_embedding = jax.random.uniform(
        k_table, (num_users, user_embedding_dim), dtype=jnp.float32)
    users = jax.random.randint(k_users, (batch,), 0, num_users, dtype=jnp.int32)

    # Eval mode: dropout is identity (module.eval() semantics).
    out_eval = user_projection(
        users, user_embedding,
        dropout_probability=dropout_probability, training=False)
    out_eval = jax.block_until_ready(out_eval)

    ref = user_embedding[users]
    assert out_eval.shape == (batch, user_embedding_dim)
    assert jnp.allclose(out_eval, ref, atol=1e-6, rtol=1e-6), "eval mismatch"

    # Training mode: inverted dropout applied inside the kernel.
    out_train = user_projection(
        users, user_embedding,
        dropout_probability=dropout_probability, training=True, rng_key=k_drop)
    out_train = jax.block_until_ready(out_train)

    scaled = ref / (1.0 - dropout_probability)
    elementwise_ok = jnp.logical_or(
        jnp.isclose(out_train, 0.0, atol=1e-6),
        jnp.isclose(out_train, scaled, atol=1e-5, rtol=1e-5))
    assert bool(jnp.all(elementwise_ok)), "training-mode dropout mismatch"

    print("KERNEL_OK")
</pallas_src>

<mosaic_0001>
module attributes {stable_mosaic.version = 11 : i64} {
  func.func @_user_projection_kernel(%arg0: i32, %arg1: memref<8x1xi32, #tpu.memory_space<vmem>>, %arg2: memref<64x128xf32, #tpu.memory_space<vmem>>, %arg3: memref<8x128xf32, #tpu.memory_space<vmem>>) attributes {dimension_semantics = [#tpu.dimension_semantics<parallel>], iteration_bounds = array<i64: 1>, scalar_prefetch = 0 : i64, scratch_operands = 0 : i64, tpu.core_type = #tpu.core_type<tc>, window_params = [{transform_indices = @transform_0, window_bounds = array<i64: 8, 1>}, {pipeline_mode = #tpu.pipeline_mode<synchronous>, transform_indices = @transform_1, window_bounds = array<i64: 64, 128>}, {transform_indices = @transform_2, window_bounds = array<i64: 8, 128>}]} {
    %c0 = arith.constant 0 : index
    %c0_0 = arith.constant 0 : index
    %0 = vector.load %arg1[%c0, %c0_0] : memref<8x1xi32, #tpu.memory_space<vmem>>, vector<8x1xi32>
    %1 = tpu.iota {dimensions = array<i32: 1>} : vector<8x64xi32>
    %2 = vector.broadcast %0 : vector<8x1xi32> to vector<8x64xi32>
    %3 = arith.cmpi eq, %1, %2 : vector<8x64xi32>
    %4 = arith.extui %3 : vector<8x64xi1> to vector<8x64xi32>
    %5 = arith.sitofp %4 : vector<8x64xi32> to vector<8x64xf32>
    %c0_1 = arith.constant 0 : index
    %c0_2 = arith.constant 0 : index
    %6 = vector.load %arg2[%c0_1, %c0_2] : memref<64x128xf32, #tpu.memory_space<vmem>>, vector<64x128xf32>
    %cst = arith.constant dense<0.000000e+00> : vector<8x128xf32>
    %7 = tpu.matmul %5, %6, %cst {dimension_numbers = #tpu.dot_dimension_numbers<[1], [0], [0], [1], [0, 0, 1, 1], [], []>} : vector<8x64xf32>, vector<64x128xf32>, vector<8x128xf32> -> vector<8x128xf32>
    %c0_3 = arith.constant 0 : index
    %c0_4 = arith.constant 0 : index
    %8 = vector.load %arg3[%c0_3, %c0_4] : memref<8x128xf32, #tpu.memory_space<vmem>>, vector<8x128xf32>
    tpu.vector_store %arg3[%c0_3, %c0_4], %7 {strides = array<i32>} : memref<8x128xf32, #tpu.memory_space<vmem>>, vector<8x128xf32>,
    return
  }
  func.func @transform_0(%arg0: i32) -> (i32, i32) {
    %c0_i32 = arith.constant 0 : i32
    %c0_i32_0 = arith.constant 0 : i32
    return %arg0, %c0_i32 : i32, i32
  }
  func.func @transform_1(%arg0: i32) -> (i32, i32) {
    %c0_i32 = arith.constant 0 : i32
    %c0_i32_0 = arith.constant 0 : i32
    %c0_i32_1 = arith.constant 0 : i32
    return %c0_i32, %c0_i32_0 : i32, i32
  }
  func.func @transform_2(%arg0: i32) -> (i32, i32) {
    %c0_i32 = arith.constant 0 : i32
    %c0_i32_0 = arith.constant 0 : i32
    return %arg0, %c0_i32 : i32, i32
  }
}

</mosaic_0001>

<llo_original>
// kernel: tpu_custom_call.1
$region0: #{tpu_custom_call.1}
  #allocation0 [shape = 'u32[]', space=smem, size = 0x4, offset = 0x4, fixed_abs, tag = 'smem constant byte address 0x4 - core index']
  #allocation1 [shape = 'u32[144,128]{1,0:T(1,128)}', space=vmem, size = 0x12000, scoped, tag = 'internal scratch']
  %s0 = inlined_call_operand.vmem [shape: s32[8,1], index: 0, kind: input, shape index: {}]
  %s1 = inlined_call_operand.hbm [shape: f32[64,128], index: 1, kind: input, shape index: {}]
  %s2 = inlined_call_operand.hbm [shape: f32[8,128], index: 2, kind: output, shape index: {}]
  %s3 = sld [smem:[#allocation0]]
  $region22: #{tpu_custom_call.1} parent=0
    _
  %s5 = ssub.s32 1, %s3
  %s6 = scalar_select 0, %s5, %s3
  $region1: #{tpu_custom_call.1} parent=0
    #allocation2 [shape = 'u8[32768]{0}', space=vmem, size = 0x8000, scoped, tag = 'input window, operand 1, single buffered']
    #allocation3 [shape = 's32[1]{0}', space=sflag, size = 0x4, scoped, tag = 'scoped memory for tpu_custom_call.1']
    #allocation4 [shape = 's32[1]{0}', space=sflag, size = 0x4, scoped, tag = 'scoped memory for tpu_custom_call.1']
    #allocation5 [shape = 'u8[4096]{0}', space=vmem, size = 0x1000, scoped, tag = 'output window, operand 0, single buffered']
    %7 = vsyncpa [#allocation3], 0
    %8 = vsyncpa [#allocation4], 0
    // Predicated region
    $region2: #{tpu_custom_call.1} parent=1 // pred_check
      _
    $region3: #{tpu_custom_call.1} parent=1 // pred_check_branch
      %10 = sbr.rel (0) target = $region5
    $region4: #{tpu_custom_call.1} parent=1 // pred_region
      _
    $region5: #{tpu_custom_call.1} parent=1 // pred_fallthru
      _
    // Predicated region
    $region6: #{tpu_custom_call.1} parent=1 // pred_check
      _
    $region7: #{tpu_custom_call.1} parent=1 // pred_check_branch
      %12 = sbr.rel (0) target = $region9
    $region8: #{tpu_custom_call.1} parent=1 // pred_region
      %s14 = ssub.s32 1024, 1024
      %15 = vsyncadd [#allocation3], %s14
      %s16 = sshll.u32 [#allocation2], 4
      %s17 = int_to_ptr.vmem [resolvable:$true] %s16
      %22 = dma.hbm_to_vmem [thread:$0]  %s1, 1024, %s17, [#allocation3], 128, 128, 8
    $region9: #{tpu_custom_call.1} parent=1 // pred_fallthru
      _
    // Predicated region
    $region10: #{tpu_custom_call.1} parent=1 // pred_check
      _
    $region11: #{tpu_custom_call.1} parent=1 // pred_check_branch
      %24 = sbr.rel (0) target = $region13
    $region12: #{tpu_custom_call.1} parent=1 // pred_region
      %25 = dma.done [#allocation3], 1024
    $region13: #{tpu_custom_call.1} parent=1 // pred_fallthru
      _
    %v26 = vld [vmem:[%s0] sm:$0xff]
    %v27 = vlaneseq
    %v28 = vand.u32 %v27, 127
    %29 = vset.pattern.permute.xlu0 0
    %30 = vperm.xlu0 %29, %v26
    %v31 = vpop.permute.xlu0 %30
    %vm32 = vcmp.eq.s32.totalorder %v28, %v31
    %v33 = vsel %vm32, 1, 0
    %v34 = vcvt.s32.f32 %v33
    %v35 = vld [vmem:[#allocation2] sm:$0xff]
    %v36 = vld [vmem:[#allocation2 + $0x8] sm:$0xff]
    %v37 = vld [vmem:[#allocation2 + $0x10] sm:$0xff]
    %v38 = vld [vmem:[#allocation2 + $0x18] sm:$0xff]
    %v39 = vld [vmem:[#allocation2 + $0x20] sm:$0xff]
    %v40 = vld [vmem:[#allocation2 + $0x28] sm:$0xff]
    %v41 = vld [vmem:[#allocation2 + $0x30] sm:$0xff]
    %v42 = vld [vmem:[#allocation2 + $0x38] sm:$0xff]
    %vm43 = vcmask 523264
    %v45 = vsel %vm43, %v34, 0
    %47 = vmatprep.subr.mxu0 0.0
    %48 = vmatpush1.msra.mxu0 0.0
    %49 = vmatprep.subr.mxu0 0.0
    %50 = vmatpush1.msra.mxu0 0.0
    %51 = vmatprep.subr.mxu0 0.0
    %52 = vmatpush1.msra.mxu0 0.0
    %53 = vmatprep.subr.mxu0 0.0
    %54 = vmatpush1.msra.mxu0 0.0
    %55 = vmatprep.subr.mxu0 0.0
    %56 = vmatpush1.msra.mxu0 0.0
    %57 = vmatprep.subr.mxu0 0.0
    %58 = vmatpush1.msra.mxu0 0.0
    %59 = vmatprep.subr.mxu0 0.0
    %60 = vmatpush1.msra.mxu0 0.0
    %61 = vmatprep.subr.mxu0 0.0
    %62 = vmatpush1.msra.mxu0 0.0
    %63 = vmatprep.subr.mxu0 0.0
    %64 = vmatpush1.msra.mxu0 %v42
    %65 = vmatprep.subr.mxu0 0.0
    %66 = vmatpush1.msra.mxu0 %v41
    %67 = vmatprep.subr.mxu0 0.0
    %68 = vmatpush1.msra.mxu0 %v40
    %69 = vmatprep.subr.mxu0 0.0
    %70 = vmatpush1.msra.mxu0 %v39
    %71 = vmatprep.subr.mxu0 0.0
    %72 = vmatpush1.msra.mxu0 %v38
    %73 = vmatprep.subr.mxu0 0.0
    %74 = vmatpush1.msra.mxu0 %v37
    %75 = vmatprep.subr.mxu0 0.0
    %76 = vmatpush1.msra.mxu0 %v36
    %77 = vmatprep.subr.mxu0 0.0
    %78 = vmatpush1.msra.mxu0 %v35
    %79 = vmatprep.subr.mxu0 0.0
    %80 = vmatpush2.msra.mxu0 0.0
    %81 = vmatprep.subr.mxu0 0.0
    %82 = vmatpush2.msra.mxu0 0.0
    %83 = vmatprep.subr.mxu0 0.0
    %84 = vmatpush2.msra.mxu0 0.0
    %85 = vmatprep.subr.mxu0 0.0
    %86 = vmatpush2.msra.mxu0 0.0
    %87 = vmatprep.subr.mxu0 0.0
    %88 = vmatpush2.msra.mxu0 0.0
    %89 = vmatprep.subr.mxu0 0.0
    %90 = vmatpush2.msra.mxu0 0.0
    %91 = vmatprep.subr.mxu0 0.0
    %92 = vmatpush2.msra.mxu0 0.0
    %93 = vmatprep.subr.mxu0 0.0
    %94 = vmatpush2.msra.mxu0 0.0
    %95 = vmatprep.subr.mxu0 0.0
    %96 = vmatpush2.msra.mxu0 0.0
    %97 = vmatprep.subr.mxu0 0.0
    %98 = vmatpush2.msra.mxu0 0.0
    %99 = vmatprep.subr.mxu0 0.0
    %100 = vmatpush2.msra.mxu0 0.0
    %101 = vmatprep.subr.mxu0 0.0
    %102 = vmatpush2.msra.mxu0 0.0
    %103 = vmatprep.subr.mxu0 0.0
    %104 = vmatpush2.msra.mxu0 0.0
    %105 = vmatprep.subr.mxu0 0.0
    %106 = vmatpush2.msra.mxu0 0.0
    %107 = vmatprep.subr.mxu0 0.0
    %108 = vmatpush2.msra.mxu0 0.0
    %109 = vmatprep.subr.mxu0 0.0
    %110 = vmatpush2.msra.mxu0 0.0
    %111 = vmatprep.mubr.f32.mxu0 0.0
    %112 = vmatmul.mubr.f32.gmra.mxu0 %v45
    %v113 = vpop.f32.mrf.mxu0
    %v114 = vadd.f32 0.0, %v113
    %v115 = vpop.f32.mrf.mxu0
    %116 = vdwg.mxu0
    %117 = vst [vmem:[#allocation5] sm:$0xff] %v114
    // Predicated region
    $region14: #{tpu_custom_call.1} parent=1 // pred_check
      _
    $region15: #{tpu_custom_call.1} parent=1 // pred_check_branch
      %119 = sbr.rel (0) target = $region17
    $region16: #{tpu_custom_call.1} parent=1 // pred_region
      %s121 = ssub.s32 128, 128
      %122 = vsyncadd [#allocation4], %s121
      %s124 = sshll.u32 [#allocation5], 4
      %s125 = int_to_ptr.vmem [resolvable:$true] %s124
      %127 = dma.vmem_to_hbm [thread:$0]  %s125, 128, %s2, [#allocation4]
    $region17: #{tpu_custom_call.1} parent=1 // pred_fallthru
      _
    // Predicated region
    $region18: #{tpu_custom_call.1} parent=1 // pred_check
      _
    $region19: #{tpu_custom_call.1} parent=1 // pred_check_branch
      %129 = sbr.rel (0) target = $region21
    $region20: #{tpu_custom_call.1} parent=1 // pred_region
      %130 = dma.done [#allocation4], 128
    $region21: #{tpu_custom_call.1} parent=1 // pred_fallthru
      _
    %131 = vsyncpa [#allocation3], 1
    %132 = vsyncpa [#allocation4], 1

</llo_original>
